<compile_context>
chip_gen: v7x
topology: tpu7x:2x2x1
jax: 0.10.0
libtpu: 0.0.40
codegen_flags: <defaults>
</compile_context>

<pallas_src>
import functools

import jax
import jax.numpy as jnp
from jax.experimental import pallas as pl
from jax.experimental.pallas import tpu as pltpu

_INV_SQRT2 = 0.7071067811865476


def _mlp_kernel(x_ref, w1_ref, b1_ref, w2_ref, b2_ref, o_ref):
    """One (row-tile, col-tile, hidden-tile) step of GELU(x@W1+b1)@W2 + b2.

    Grid = (M//tm, D//tn, H//th). Axis 2 (hidden) is the reduction; the output
    block index is j-invariant, so o_ref is VMEM-resident across it and is
    used directly as the f32 accumulator (no separate scratch).
    """
    j = pl.program_id(2)

    @pl.when(j == 0)
    def _init():
        o_ref[...] = jnp.zeros_like(o_ref)

    # (tm, D)bf16 @ (D, th)bf16 -> f32 on the MXU
    h = jnp.dot(x_ref[...], w1_ref[...], preferred_element_type=jnp.float32)
    h = h + b1_ref[...]
    # Exact GELU (erf form) in f32 — matches torch.nn.GELU() default.
    h = 0.5 * h * (1.0 + jax.lax.erf(h * _INV_SQRT2))
    # (tm, th)bf16 @ (th, tn)bf16 -> f32, accumulated into the resident output.
    o_ref[...] += jnp.dot(h.astype(w2_ref.dtype), w2_ref[...],
                          preferred_element_type=jnp.float32)

    @pl.when(j == pl.num_programs(2) - 1)
    def _finalize():
        o_ref[...] += b2_ref[...]


def _round_up(x, m):
    return (x + m - 1) // m * m


def _pick_tile(total, candidates):
    for c in candidates:
        if total % c == 0:
            return c
    return total  # fallback: full extent (legal per BlockSpec rules)


def _device_budget():
    """(default row tile, scoped-VMEM limit bytes, allow N-split) per chip."""
    try:
        kind = jax.devices()[0].device_kind.lower()
    except Exception:  # pragma: no cover - defensive
        kind = ""
    if "v6" in kind:                      # 128 MiB VMEM, ~650-row roofline
        return 768, 100 * 2**20, False
    if "v5" in kind:                      # 128 MiB VMEM, ~240-row roofline
        return 512, 100 * 2**20, False
    # v7x (64 MiB per-TC, 2 TCs) or unknown -> conservative v7x-like budget.
    return 512, 50 * 2**20, True


@functools.partial(jax.jit, static_argnames=("tm", "tn", "th", "vmem_limit"))
def _mlp_pallas_grid(x_bf, w1_bf, b1_2d, w2_bf, b2_2d, *, tm, tn, th, vmem_limit):
    M, D = x_bf.shape
    H = w1_bf.shape[1]
    n_m, n_n, n_h = M // tm, D // tn, H // th
    grid = (n_m, n_n, n_h)

    cost = pl.CostEstimate(
        # First matmul is recomputed once per output-column tile.
        flops=2 * M * D * H * (n_n + 1),
        transcendentals=M * H * n_n,
        bytes_accessed=(
            x_bf.size * 2                      # x streamed once (resident per i)
            + w1_bf.size * 2 * n_m * n_n       # W1 re-streamed per (row, col) tile
            + w2_bf.size * 2 * n_m             # W2 re-streamed per row tile
            + b1_2d.size * 4 * n_m * n_n
            + b2_2d.size * 4 * n_m
            + M * D * 4                        # f32 output writeback
        ),
    )

    return pl.pallas_call(
        _mlp_kernel,
        out_shape=jax.ShapeDtypeStruct((M, D), jnp.float32),
        grid_spec=pltpu.PrefetchScalarGridSpec(
            num_scalar_prefetch=0,
            grid=grid,
            in_specs=[
                pl.BlockSpec((tm, D), lambda i, n, j: (i, 0)),   # x row-tile (resident)
                pl.BlockSpec((D, th), lambda i, n, j: (0, j)),   # W1 hidden-slab
                pl.BlockSpec((1, th), lambda i, n, j: (0, j)),   # b1 hidden-slab
                pl.BlockSpec((th, tn), lambda i, n, j: (j, n)),  # W2 hidden x col tile
                pl.BlockSpec((1, tn), lambda i, n, j: (0, n)),   # b2 col tile
            ],
            out_specs=pl.BlockSpec((tm, tn), lambda i, n, j: (i, n)),
        ),
        compiler_params=pltpu.CompilerParams(
            dimension_semantics=("parallel", "parallel", "arbitrary"),
            vmem_limit_bytes=vmem_limit,
        ),
        cost_estimate=cost,
    )(x_bf, w1_bf, b1_2d, w2_bf, b2_2d)


def mlp_pallas(x, w1, b1, w2, b2, *, tm=None, th=512):
    """x: (..., D) f32. w1: (D, 4D), b1: (4D,), w2: (4D, D), b2: (D,)."""
    orig_shape = x.shape
    D = orig_shape[-1]
    H = w1.shape[1]
    x2d = x.reshape(-1, D)
    M = x2d.shape[0]

    tm_def, vmem_limit, allow_n_split = _device_budget()
    if tm is None:
        tm = tm_def

    # Row tile: target the per-generation default, never exceed (8-rounded) M.
    tm_eff = min(tm, _round_up(M, 8))
    # Hidden tile: largest lane-aligned tile (<=th) that divides H.
    th_eff = _pick_tile(H, [c for c in (th, 512, 256, 128) if c <= H])
    # Output-column tile: split only for the single-row-tile (decode) case on
    # multi-TC chips, so the second core has work; otherwise keep the full D.
    tn_eff = D
    if (allow_n_split and _round_up(M, tm_eff) == tm_eff
            and D >= 1024 and D % 256 == 0):
        tn_eff = D // 2

    # VMEM safety net: double-buffered working-set estimate vs. the budget.
    def _ws(tm_, th_, tn_):
        return 2 * (tm_ * D * 2 + D * th_ * 2 + th_ * tn_ * 2
                    + tm_ * tn_ * 4 + th_ * 4 + tn_ * 4)

    budget = int(vmem_limit * 0.85)
    while _ws(tm_eff, th_eff, tn_eff) > budget and tm_eff > 256:
        tm_eff = max(256, _round_up(tm_eff // 2, 8))
    while _ws(tm_eff, th_eff, tn_eff) > budget and th_eff >= 256 and th_eff % 256 == 0:
        th_eff //= 2

    M_pad = _round_up(M, tm_eff)
    if M_pad != M:
        x2d = jnp.pad(x2d, ((0, M_pad - M), (0, 0)))

    out = _mlp_pallas_grid(
        x2d.astype(jnp.bfloat16),
        w1.astype(jnp.bfloat16),
        b1.reshape(1, H).astype(jnp.float32),
        w2.astype(jnp.bfloat16),
        b2.reshape(1, D).astype(jnp.float32),
        tm=tm_eff,
        tn=tn_eff,
        th=th_eff,
        vmem_limit=vmem_limit,
    )
    if M_pad != M:
        out = out[:M]
    return out.reshape(orig_shape).astype(x.dtype)


def init_mlp_params(key, n_embd):
    """nn.Linear-style init (U(-1/sqrt(in), 1/sqrt(in))), weights pre-transposed
    to (in_features, out_features)."""
    k1, k2, k3, k4 = jax.random.split(key, 4)
    h = 4 * n_embd
    bound1 = 1.0 / jnp.sqrt(n_embd)
    bound2 = 1.0 / jnp.sqrt(h)
    w1 = jax.random.uniform(k1, (n_embd, h), jnp.float32, -bound1, bound1)
    b1 = jax.random.uniform(k2, (h,), jnp.float32, -bound1, bound1)
    w2 = jax.random.uniform(k3, (h, n_embd), jnp.float32, -bound2, bound2)
    b2 = jax.random.uniform(k4, (n_embd,), jnp.float32, -bound2, bound2)
    return w1, b1, w2, b2


def mlp_ref(x, w1, b1, w2, b2):
    h = x @ w1 + b1
    h = jax.nn.gelu(h, approximate=False)
    return h @ w2 + b2


if __name__ == "__main__":
    key = jax.random.PRNGKey(0)
    kx, kp = jax.random.split(key)

    batch, seq, n_embd = 2, 8, 32
    x = jax.random.normal(kx, (batch, seq, n_embd), jnp.float32)
    w1, b1, w2, b2 = init_mlp_params(kp, n_embd)

    out = mlp_pallas(x, w1, b1, w2, b2)
    jax.block_until_ready(out)

    ref = mlp_ref(x.reshape(-1, n_embd), w1, b1, w2, b2).reshape(x.shape)
    # bf16 MXU inputs with f32 accumulation -> bf16-appropriate tolerance.
    assert jnp.allclose(out, ref, atol=2e-2, rtol=2e-2), "mismatch vs reference"

    print("KERNEL_OK")
</pallas_src>

<mosaic_0001>
module attributes {stable_mosaic.version = 11 : i64} {
  func.func @_mlp_kernel(%arg0: i32, %arg1: i32, %arg2: i32, %arg3: memref<16x32xbf16, #tpu.memory_space<vmem>>, %arg4: memref<32x128xbf16, #tpu.memory_space<vmem>>, %arg5: memref<1x128xf32, #tpu.memory_space<vmem>>, %arg6: memref<128x32xbf16, #tpu.memory_space<vmem>>, %arg7: memref<1x32xf32, #tpu.memory_space<vmem>>, %arg8: memref<16x32xf32, #tpu.memory_space<vmem>>) attributes {dimension_semantics = [#tpu.dimension_semantics<parallel>, #tpu.dimension_semantics<parallel>, #tpu.dimension_semantics<arbitrary>], iteration_bounds = array<i64: 1, 1, 1>, scalar_prefetch = 0 : i64, scratch_operands = 0 : i64, tpu.core_type = #tpu.core_type<tc>, window_params = [{transform_indices = @transform_0, window_bounds = array<i64: 16, 32>}, {transform_indices = @transform_1, window_bounds = array<i64: 32, 128>}, {transform_indices = @transform_2, window_bounds = array<i64: 1, 128>}, {transform_indices = @transform_3, window_bounds = array<i64: 128, 32>}, {transform_indices = @transform_4, window_bounds = array<i64: 1, 32>}, {transform_indices = @transform_5, window_bounds = array<i64: 16, 32>}]} {
    %c0_i32 = arith.constant 0 : i32
    %0 = arith.cmpi eq, %arg2, %c0_i32 : i32
    %1 = arith.extui %0 : i1 to i32
    %c0_i32_0 = arith.constant 0 : i32
    %2 = arith.cmpi ne, %1, %c0_i32_0 : i32
    scf.if %2 {
      %cst_18 = arith.constant 0.000000e+00 : f32
      %26 = vector.broadcast %cst_18 : f32 to vector<16x32xf32>
      %c0_19 = arith.constant 0 : index
      %c0_20 = arith.constant 0 : index
      %27 = vector.load %arg8[%c0_19, %c0_20] : memref<16x32xf32, #tpu.memory_space<vmem>>, vector<16x32xf32>
      tpu.vector_store %arg8[%c0_19, %c0_20], %26 {strides = array<i32>} : memref<16x32xf32, #tpu.memory_space<vmem>>, vector<16x32xf32>,
    } else {
    }
    %c0 = arith.constant 0 : index
    %c0_1 = arith.constant 0 : index
    %3 = vector.load %arg3[%c0, %c0_1] : memref<16x32xbf16, #tpu.memory_space<vmem>>, vector<16x32xbf16>
    %c0_2 = arith.constant 0 : index
    %c0_3 = arith.constant 0 : index
    %4 = vector.load %arg4[%c0_2, %c0_3] : memref<32x128xbf16, #tpu.memory_space<vmem>>, vector<32x128xbf16>
    %cst = arith.constant dense<0.000000e+00> : vector<16x128xf32>
    %5 = tpu.matmul %3, %4, %cst {dimension_numbers = #tpu.dot_dimension_numbers<[1], [0], [0], [1], [0, 0, 1, 1], [], []>} : vector<16x32xbf16>, vector<32x128xbf16>, vector<16x128xf32> -> vector<16x128xf32>
    %c0_4 = arith.constant 0 : index
    %c0_5 = arith.constant 0 : index
    %6 = vector.load %arg5[%c0_4, %c0_5] : memref<1x128xf32, #tpu.memory_space<vmem>>, vector<1x128xf32>
    %7 = vector.broadcast %6 : vector<1x128xf32> to vector<16x128xf32>
    %8 = arith.addf %5, %7 : vector<16x128xf32>
    %cst_6 = arith.constant 5.000000e-01 : f32
    %9 = vector.broadcast %cst_6 : f32 to vector<16x128xf32>
    %10 = arith.mulf %9, %8 : vector<16x128xf32>
    %cst_7 = arith.constant 0.707106769 : f32
    %11 = vector.broadcast %cst_7 : f32 to vector<16x128xf32>
    %12 = arith.mulf %8, %11 : vector<16x128xf32>
    %13 = math.erf %12 : vector<16x128xf32>
    %cst_8 = arith.constant 1.000000e+00 : f32
    %14 = vector.broadcast %cst_8 : f32 to vector<16x128xf32>
    %15 = arith.addf %14, %13 : vector<16x128xf32>
    %16 = arith.mulf %10, %15 : vector<16x128xf32>
    %c0_9 = arith.constant 0 : index
    %c0_10 = arith.constant 0 : index
    %17 = vector.load %arg8[%c0_9, %c0_10] : memref<16x32xf32, #tpu.memory_space<vmem>>, vector<16x32xf32>
    %18 = arith.truncf %16 : vector<16x128xf32> to vector<16x128xbf16>
    %c0_11 = arith.constant 0 : index
    %c0_12 = arith.constant 0 : index
    %19 = vector.load %arg6[%c0_11, %c0_12] : memref<128x32xbf16, #tpu.memory_space<vmem>>, vector<128x32xbf16>
    %cst_13 = arith.constant dense<0.000000e+00> : vector<16x32xf32>
    %20 = tpu.matmul %18, %19, %cst_13 {dimension_numbers = #tpu.dot_dimension_numbers<[1], [0], [0], [1], [0, 0, 1, 1], [], []>} : vector<16x128xbf16>, vector<128x32xbf16>, vector<16x32xf32> -> vector<16x32xf32>
    %21 = arith.addf %17, %20 : vector<16x32xf32>
    %c0_14 = arith.constant 0 : index
    %c0_15 = arith.constant 0 : index
    %22 = vector.load %arg8[%c0_14, %c0_15] : memref<16x32xf32, #tpu.memory_space<vmem>>, vector<16x32xf32>
    tpu.vector_store %arg8[%c0_14, %c0_15], %21 {strides = array<i32>} : memref<16x32xf32, #tpu.memory_space<vmem>>, vector<16x32xf32>,
    %c0_i32_16 = arith.constant 0 : i32
    %23 = arith.cmpi eq, %arg2, %c0_i32_16 : i32
    %24 = arith.extui %23 : i1 to i32
    %c0_i32_17 = arith.constant 0 : i32
    %25 = arith.cmpi ne, %24, %c0_i32_17 : i32
    scf.if %25 {
      %c0_18 = arith.constant 0 : index
      %c0_19 = arith.constant 0 : index
      %26 = vector.load %arg8[%c0_18, %c0_19] : memref<16x32xf32, #tpu.memory_space<vmem>>, vector<16x32xf32>
      %c0_20 = arith.constant 0 : index
      %c0_21 = arith.constant 0 : index
      %27 = vector.load %arg7[%c0_20, %c0_21] : memref<1x32xf32, #tpu.memory_space<vmem>>, vector<1x32xf32>
      %28 = vector.broadcast %27 : vector<1x32xf32> to vector<16x32xf32>
      %29 = arith.addf %26, %28 : vector<16x32xf32>
      %c0_22 = arith.constant 0 : index
      %c0_23 = arith.constant 0 : index
      %30 = vector.load %arg8[%c0_22, %c0_23] : memref<16x32xf32, #tpu.memory_space<vmem>>, vector<16x32xf32>
      tpu.vector_store %arg8[%c0_22, %c0_23], %29 {strides = array<i32>} : memref<16x32xf32, #tpu.memory_space<vmem>>, vector<16x32xf32>,
    } else {
    }
    return
  }
  func.func @transform_0(%arg0: i32, %arg1: i32, %arg2: i32) -> (i32, i32) {
    %c0_i32 = arith.constant 0 : i32
    %c0_i32_0 = arith.constant 0 : i32
    return %arg0, %c0_i32 : i32, i32
  }
  func.func @transform_1(%arg0: i32, %arg1: i32, %arg2: i32) -> (i32, i32) {
    %c0_i32 = arith.constant 0 : i32
    %c0_i32_0 = arith.constant 0 : i32
    return %c0_i32, %arg2 : i32, i32
  }
  func.func @transform_2(%arg0: i32, %arg1: i32, %arg2: i32) -> (i32, i32) {
    %c0_i32 = arith.constant 0 : i32
    %c0_i32_0 = arith.constant 0 : i32
    return %c0_i32, %arg2 : i32, i32
  }
  func.func @transform_3(%arg0: i32, %arg1: i32, %arg2: i32) -> (i32, i32) {
    %c0_i32 = arith.constant 0 : i32
    return %arg2, %arg1 : i32, i32
  }
  func.func @transform_4(%arg0: i32, %arg1: i32, %arg2: i32) -> (i32, i32) {
    %c0_i32 = arith.constant 0 : i32
    %c0_i32_0 = arith.constant 0 : i32
    return %c0_i32, %arg1 : i32, i32
  }
  func.func @transform_5(%arg0: i32, %arg1: i32, %arg2: i32) -> (i32, i32) {
    %c0_i32 = arith.constant 0 : i32
    return %arg0, %arg1 : i32, i32
  }
}

</mosaic_0001>

<llo_original>
// kernel: _mlp_pallas_grid.1
$region0: #{_mlp_pallas_grid.1}
  #allocation0 [shape = 'u32[]', space=smem, size = 0x4, offset = 0x4, fixed_abs, tag = 'smem constant byte address 0x4 - core index']
  #allocation1 [shape = 'u32[144,128]{1,0:T(1,128)}', space=vmem, size = 0x12000, scoped, tag = 'internal scratch']
  %s0 = inlined_call_operand.vmem [shape: bf16[16,32], index: 0, kind: input, shape index: {}]
  %s1 = inlined_call_operand.vmem [shape: bf16[32,128], index: 1, kind: input, shape index: {}]
  %s2 = inlined_call_operand.vmem [shape: f32[1,128], index: 2, kind: input, shape index: {}]
  %s3 = inlined_call_operand.vmem [shape: bf16[128,32], index: 3, kind: input, shape index: {}]
  %s4 = inlined_call_operand.vmem [shape: f32[1,32], index: 4, kind: input, shape index: {}]
  %s5 = inlined_call_operand.hbm [shape: f32[16,32], index: 5, kind: output, shape index: {}]
  %s6 = sld [smem:[#allocation0]]
  $region38: #{_mlp_pallas_grid.1} parent=0
    _
  %s8 = ssub.s32 1, %s6
  %s9 = scalar_select 0, %s8, %s6
  $region1: #{_mlp_pallas_grid.1} parent=0
    #allocation2 [shape = 'u8[8192]{0}', space=vmem, size = 0x2000, scoped, tag = 'output window, operand 0, single buffered']
    #allocation3 [shape = 's32[1]{0}', space=sflag, size = 0x4, scoped, tag = 'scoped memory for _mlp_pallas_grid.1']
    %10 = vsyncpa [#allocation3], 0
    // Predicated region
    $region2: #{_mlp_pallas_grid.1} parent=1 // pred_check
      _
    $region3: #{_mlp_pallas_grid.1} parent=1 // pred_check_branch
      %12 = sbr.rel (0) target = $region5
    $region4: #{_mlp_pallas_grid.1} parent=1 // pred_region
      _
    $region5: #{_mlp_pallas_grid.1} parent=1 // pred_fallthru
      _
    // Predicated region
    $region6: #{_mlp_pallas_grid.1} parent=1 // pred_check
      _
    $region7: #{_mlp_pallas_grid.1} parent=1 // pred_check_branch
      %14 = sbr.rel (0) target = $region9
    $region8: #{_mlp_pallas_grid.1} parent=1 // pred_region
      _
    $region9: #{_mlp_pallas_grid.1} parent=1 // pred_fallthru
      _
    // Predicated region
    $region10: #{_mlp_pallas_grid.1} parent=1 // pred_check
      _
    $region11: #{_mlp_pallas_grid.1} parent=1 // pred_check_branch
      %16 = sbr.rel (0) target = $region13
    $region12: #{_mlp_pallas_grid.1} parent=1 // pred_region
      _
    $region13: #{_mlp_pallas_grid.1} parent=1 // pred_fallthru
      _
    // Predicated region
    $region14: #{_mlp_pallas_grid.1} parent=1 // pred_check
      _
    $region15: #{_mlp_pallas_grid.1} parent=1 // pred_check_branch
      %18 = sbr.rel (0) target = $region17
    $region16: #{_mlp_pallas_grid.1} parent=1 // pred_region
      _
    $region17: #{_mlp_pallas_grid.1} parent=1 // pred_fallthru
      _
    // Predicated region
    $region18: #{_mlp_pallas_grid.1} parent=1 // pred_check
      _
    $region19: #{_mlp_pallas_grid.1} parent=1 // pred_check_branch
      %20 = sbr.rel (0) target = $region21
    $region20: #{_mlp_pallas_grid.1} parent=1 // pred_region
      _
    $region21: #{_mlp_pallas_grid.1} parent=1 // pred_fallthru
      _
    %p22 = scmp.eq.s32.totalorder 0, 0
    // Predicated region
    $region22: #{_mlp_pallas_grid.1} parent=1 // pred_check
      %p23 = pneg %p22
    $region23: #{_mlp_pallas_grid.1} parent=1 // pred_check_branch
      %25 = sbr.rel (%p23) target = $region25
    $region24: #{_mlp_pallas_grid.1} parent=1 // pred_region
      %vm26 = vcmask 261120
      %27 = vst.msk [vmem:[#allocation2] sm:$0xff] %vm26, 0.0
      %28 = vst.msk [vmem:[#allocation2 + $0x8] sm:$0xff] %vm26, 0.0
    $region25: #{_mlp_pallas_grid.1} parent=1 // pred_fallthru
      _
    %v29 = vld [vmem:[%s0] sm:$0xf]
    %v30 = vld [vmem:[%s0 + $0x4] sm:$0xf]
    %v31 = vld [vmem:[%s1] sm:$0xf]
    %v32 = vld [vmem:[%s1 + $0x4] sm:$0xf]
    %v33 = vld [vmem:[%s1 + $0x8] sm:$0xf]
    %v34 = vld [vmem:[%s1 + $0xc] sm:$0xf]
    %v35 = vld [vmem:[%s2] sm:$0x1]
    %v37 = vlaneseq
    %v38 = vshrl.u32 %v37, 7
    %v39 = vsub.s32 0, %v38
    %v40 = vrot.slane %v35, %v39
    %v44 = vunpack.c.l.b16 %v29
    %v45 = vunpack.c.l.b16 %v30
    %v46 = vpack.c.b16 %v45, %v44
    %v51 = vunpack.c.l.b16 %v31
    %v52 = vunpack.c.l.b16 %v32
    %v53 = vunpack.c.l.b16 %v33
    %v54 = vunpack.c.l.b16 %v34
    %v55 = vpack.c.b16 %v52, %v51
    %v56 = vpack.c.b16 %v54, %v53
    %vm59 = vcmask 261120
    %v61 = vsel %vm59, %v46, 0
    %63 = vmatprep.subr.bf16.mxu0 0
    %64 = vmatpush1.bf16.msra.mxu0 %v55
    %65 = vmatprep.subr.bf16.mxu0 0
    %66 = vmatpush1.bf16.msra.mxu0 %v56
    %67 = vmatprep.subr.bf16.mxu0 0
    %68 = vmatpush1.bf16.msra.mxu0 0
    %69 = vmatprep.subr.bf16.mxu0 0
    %70 = vmatpush1.bf16.msra.mxu0 0
    %71 = vmatprep.subr.bf16.mxu0 0
    %72 = vmatpush1.bf16.msra.mxu0 0
    %73 = vmatprep.subr.bf16.mxu0 0
    %74 = vmatpush1.bf16.msra.mxu0 0
    %75 = vmatprep.subr.bf16.mxu0 0
    %76 = vmatpush1.bf16.msra.mxu0 0
    %77 = vmatprep.subr.bf16.mxu0 0
    %78 = vmatpush1.bf16.msra.mxu0 0
    %79 = vmatprep.subr.bf16.mxu0 0
    %80 = vmatpush1.bf16.msra.mxu0 0
    %81 = vmatprep.subr.bf16.mxu0 0
    %82 = vmatpush1.bf16.msra.mxu0 0
    %83 = vmatprep.subr.bf16.mxu0 0
    %84 = vmatpush1.bf16.msra.mxu0 0
    %85 = vmatprep.subr.bf16.mxu0 0
    %86 = vmatpush1.bf16.msra.mxu0 0
    %87 = vmatprep.subr.bf16.mxu0 0
    %88 = vmatpush1.bf16.msra.mxu0 0
    %89 = vmatprep.subr.bf16.mxu0 0
    %90 = vmatpush1.bf16.msra.mxu0 0
    %91 = vmatprep.subr.bf16.mxu0 0
    %92 = vmatpush1.bf16.msra.mxu0 0
    %93 = vmatprep.subr.bf16.mxu0 0
    %94 = vmatpush1.bf16.msra.mxu0 0
    %95 = vmatprep.mubr.bf16.mxu0 0
    %96 = vmatmul.mubr.bf16.gmra.mrb[0].mxu0 %v61
    %v97 = vpop.f32.mrb[0].mxu0
    %v98 = vadd.f32 %v40, %v97
    %v99 = vpop.f32.mrb[0].mxu0
    %v100 = vpop.f32.mrb[0].mxu0
    %v101 = vadd.f32 %v40, %v100
    %v102 = vpop.f32.mrb[0].mxu0
    %103 = vdwg.mxu0
    %v104 = vmul.f32 %v98, 0.5
    %v105 = vmul.f32 %v101, 0.5
    %v106 = vmul.f32 %v98, 0.70710677
    %v107 = vmul.f32 %v101, 0.70710677
    %v108 = verf.f32.pop %v106
    %v109 = verf.f32.pop %v107
    %v110 = vadd.f32 %v108, 1.0
    %v111 = vadd.f32 %v109, 1.0
    %v112 = vmul.f32 %v104, %v110
    %v113 = vmul.f32 %v105, %v111
    %v114 = vld [vmem:[#allocation2] sm:$0xff]
    %v115 = vld [vmem:[#allocation2 + $0x8] sm:$0xff]
    %v116 = vpack.c.bf16 %v113, %v112
    %v117 = vld [vmem:[%s3] sm:$0xf]
    %v118 = vld [vmem:[%s3 + $0x4] sm:$0xf]
    %v119 = vld [vmem:[%s3 + $0x8] sm:$0xf]
    %v120 = vld [vmem:[%s3 + $0xc] sm:$0xf]
    %v121 = vld [vmem:[%s3 + $0x10] sm:$0xf]
    %v122 = vld [vmem:[%s3 + $0x14] sm:$0xf]
    %v123 = vld [vmem:[%s3 + $0x18] sm:$0xf]
    %v124 = vld [vmem:[%s3 + $0x1c] sm:$0xf]
    %v125 = vld [vmem:[%s3 + $0x20] sm:$0xf]
    %v126 = vld [vmem:[%s3 + $0x24] sm:$0xf]
    %v127 = vld [vmem:[%s3 + $0x28] sm:$0xf]
    %v128 = vld [vmem:[%s3 + $0x2c] sm:$0xf]
    %v129 = vld [vmem:[%s3 + $0x30] sm:$0xf]
    %v130 = vld [vmem:[%s3 + $0x34] sm:$0xf]
    %v131 = vld [vmem:[%s3 + $0x38] sm:$0xf]
    %v132 = vld [vmem:[%s3 + $0x3c] sm:$0xf]
    %v149 = vunpack.c.l.b16 %v117
    %v150 = vunpack.c.l.b16 %v118
    %v151 = vunpack.c.l.b16 %v119
    %v152 = vunpack.c.l.b16 %v120
    %v153 = vunpack.c.l.b16 %v121
    %v154 = vunpack.c.l.b16 %v122
    %v155 = vunpack.c.l.b16 %v123
    %v156 = vunpack.c.l.b16 %v124
    %v157 = vunpack.c.l.b16 %v125
    %v158 = vunpack.c.l.b16 %v126
    %v159 = vunpack.c.l.b16 %v127
    %v160 = vunpack.c.l.b16 %v128
    %v161 = vunpack.c.l.b16 %v129
    %v162 = vunpack.c.l.b16 %v130
    %v163 = vunpack.c.l.b16 %v131
    %v164 = vunpack.c.l.b16 %v132
    %v165 = vpack.c.b16 %v150, %v149
    %v166 = vpack.c.b16 %v152, %v151
    %v167 = vpack.c.b16 %v154, %v153
    %v168 = vpack.c.b16 %v156, %v155
    %v169 = vpack.c.b16 %v158, %v157
    %v170 = vpack.c.b16 %v160, %v159
    %v171 = vpack.c.b16 %v162, %v161
    %v172 = vpack.c.b16 %v164, %v163
    %181 = vmatprep.subr.bf16.mxu0 0
    %182 = vmatpush1.bf16.msra.mxu0 %v165
    %183 = vmatprep.subr.bf16.mxu0 0
    %184 = vmatpush1.bf16.msra.mxu0 %v166
    %185 = vmatprep.subr.bf16.mxu0 0
    %186 = vmatpush1.bf16.msra.mxu0 %v167
    %187 = vmatprep.subr.bf16.mxu0 0
    %188 = vmatpush1.bf16.msra.mxu0 %v168
    %189 = vmatprep.subr.bf16.mxu0 0
    %190 = vmatpush1.bf16.msra.mxu0 %v169
    %191 = vmatprep.subr.bf16.mxu0 0
    %192 = vmatpush1.bf16.msra.mxu0 %v170
    %193 = vmatprep.subr.bf16.mxu0 0
    %194 = vmatpush1.bf16.msra.mxu0 %v171
    %195 = vmatprep.subr.bf16.mxu0 0
    %196 = vmatpush1.bf16.msra.mxu0 %v172
    %197 = vmatprep.subr.bf16.mxu0 0
    %198 = vmatpush1.bf16.msra.mxu0 0
    %199 = vmatprep.subr.bf16.mxu0 0
    %200 = vmatpush1.bf16.msra.mxu0 0
    %201 = vmatprep.subr.bf16.mxu0 0
    %202 = vmatpush1.bf16.msra.mxu0 0
    %203 = vmatprep.subr.bf16.mxu0 0
    %204 = vmatpush1.bf16.msra.mxu0 0
    %205 = vmatprep.subr.bf16.mxu0 0
    %206 = vmatpush1.bf16.msra.mxu0 0
    %207 = vmatprep.subr.bf16.mxu0 0
    %208 = vmatpush1.bf16.msra.mxu0 0
    %209 = vmatprep.subr.bf16.mxu0 0
    %210 = vmatpush1.bf16.msra.mxu0 0
    %211 = vmatprep.subr.bf16.mxu0 0
    %212 = vmatpush1.bf16.msra.mxu0 0
    %213 = vmatprep.mubr.bf16.mxu0 0
    %214 = vmatmul.mubr.bf16.gmra.mrb[0].mxu0 %v116
    %v215 = vpop.f32.mrb[0].mxu0
    %v216 = vadd.f32 0.0, %v215
    %v217 = vpop.f32.mrb[0].mxu0
    %v218 = vpop.f32.mrb[0].mxu0
    %v219 = vadd.f32 0.0, %v218
    %v220 = vpop.f32.mrb[0].mxu0
    %221 = vdwg.mxu0
    %v222 = vadd.f32 %v114, %v216
    %v223 = vadd.f32 %v115, %v219
    %224 = vst.msk [vmem:[#allocation2] sm:$0xff] %vm59, %v222
    %225 = vst.msk [vmem:[#allocation2 + $0x8] sm:$0xff] %vm59, %v223
    // Predicated region
    $region26: #{_mlp_pallas_grid.1} parent=1 // pred_check
      %p226 = pneg %p22
    $region27: #{_mlp_pallas_grid.1} parent=1 // pred_check_branch
      %228 = sbr.rel (%p226) target = $region29
    $region28: #{_mlp_pallas_grid.1} parent=1 // pred_region
      %v229 = vld [vmem:[#allocation2] sm:$0xff]
      %v230 = vld [vmem:[#allocation2 + $0x8] sm:$0xff]
      %v231 = vld [vmem:[%s4] sm:$0x1]
      %v233 = vlaneseq
      %v234 = vshrl.u32 %v233, 7
      %v235 = vsub.s32 0, %v234
      %v236 = vrot.slane %v231, %v235
      %v238 = vadd.f32 %v229, %v236
      %v239 = vadd.f32 %v230, %v236
      %240 = vst.msk [vmem:[#allocation2] sm:$0xff] %vm59, %v238
      %241 = vst.msk [vmem:[#allocation2 + $0x8] sm:$0xff] %vm59, %v239
    $region29: #{_mlp_pallas_grid.1} parent=1 // pred_fallthru
      _
    // Predicated region
    $region30: #{_mlp_pallas_grid.1} parent=1 // pred_check
      _
    $region31: #{_mlp_pallas_grid.1} parent=1 // pred_check_branch
      %243 = sbr.rel (0) target = $region33
    $region32: #{_mlp_pallas_grid.1} parent=1 // pred_region
      %s245 = ssub.s32 256, 256
      %246 = vsyncadd [#allocation3], %s245
      %s247 = sshll.u32 [#allocation2], 4
      %s248 = int_to_ptr.vmem [resolvable:$true] %s247
      %253 = dma.vmem_to_hbm [thread:$0]  %s248, 256, %s5, [#allocation3], 128, 128, 8
    $region33: #{_mlp_pallas_grid.1} parent=1 // pred_fallthru
      _
    // Predicated region
    $region34: #{_mlp_pallas_grid.1} parent=1 // pred_check
      _
    $region35: #{_mlp_pallas_grid.1} parent=1 // pred_check_branch
      %255 = sbr.rel (0) target = $region37
    $region36: #{_mlp_pallas_grid.1} parent=1 // pred_region
      %256 = dma.done [#allocation3], 256
    $region37: #{_mlp_pallas_grid.1} parent=1 // pred_fallthru
      _
    %257 = vsyncpa [#allocation3], 1

</llo_original>
